<compile_context>
chip_gen: v5e
topology: v5e:2x2
jax: 0.10.0
libtpu: 0.0.40
codegen_flags: <defaults>
</compile_context>

<pallas_src>
import functools

import jax
import jax.numpy as jnp
from jax.experimental import pallas as pl
from jax.experimental.pallas import tpu as pltpu

HIDDEN = 64        # logical hidden size (matches the torch module)
HIDDEN_PAD = 128   # padded hidden: full 128-lane vreg / MXU tile
LANE = 128
SUBLANE = 16       # bf16 output packs 16 sublanes per vreg


def _round_up(n, m):
    return (n + m - 1) // m * m


def actor_critic_kernel(x_ref, w1_ref, b1_ref, w2_ref, b2_ref, wh_ref, bh_ref,
                        out_ref, *, head_pad):
    # fc1 + relu  (all-f32 compute; MXU has large slack at these shapes)
    h1 = jnp.dot(x_ref[...], w1_ref[...], preferred_element_type=jnp.float32)
    h1 = jnp.maximum(h1 + b1_ref[...], 0.0)

    # fc2 + relu
    h2 = jnp.dot(h1, w2_ref[...], preferred_element_type=jnp.float32)
    h2 = jnp.maximum(h2 + b2_ref[...], 0.0)

    # fused actor heads: z columns [0, head_pad) -> mu, [head_pad, 2*head_pad) -> std
    z = jnp.dot(h2, wh_ref[...], preferred_element_type=jnp.float32) + bh_ref[...]

    loc = jnp.tanh(z)
    # numerically stable softplus
    scale = jnp.maximum(z, 0.0) + jnp.log1p(jnp.exp(-jnp.abs(z))) + 0.001
    lane = jax.lax.broadcasted_iota(jnp.int32, z.shape, 1)
    # one unmasked, lane-dense bf16 store of the whole [tb, 2*head_pad] slab
    out_ref[...] = jnp.where(lane < head_pad, loc, scale).astype(out_ref.dtype)


def actor_critic_forward(x, prepared_params, out_dim, head_pad, *, block_b=2048):
    """x: [B, in_dim] f32 -> (loc [B, out_dim], scale [B, out_dim]) bf16."""
    w1, b1, w2, b2, wh, bh = prepared_params
    B, in_dim = x.shape
    out_w = 2 * head_pad

    # Batch tile: multiple of 16 sublanes, <= block_b, capped near ceil(B/2) so
    # the grid keeps >= 2 "parallel" steps whenever the batch can be split.
    tb = max(SUBLANE, min(block_b, _round_up(pl.cdiv(B, 2), SUBLANE)))
    bp = _round_up(B, tb)
    if bp != B:
        x = jnp.pad(x, ((0, bp - B), (0, 0)))
    grid = (bp // tb,)

    cost = pl.CostEstimate(
        flops=int(2 * bp * (in_dim * HIDDEN_PAD
                            + HIDDEN_PAD * HIDDEN_PAD
                            + HIDDEN_PAD * out_w)),
        transcendentals=int(3 * bp * out_w),          # tanh, exp, log1p
        bytes_accessed=int(bp * in_dim * 4
                           + sum(int(a.size) * a.dtype.itemsize
                                 for a in prepared_params)
                           + bp * out_w * 2),
    )

    full = lambda i: (0, 0)
    batched = lambda i: (i, 0)

    out = pl.pallas_call(
        functools.partial(actor_critic_kernel, head_pad=head_pad),
        out_shape=jax.ShapeDtypeStruct((bp, out_w), jnp.bfloat16),
        grid=grid,
        in_specs=[
            pl.BlockSpec((tb, in_dim), batched),            # x
            pl.BlockSpec((in_dim, HIDDEN_PAD), full),       # w1
            pl.BlockSpec((1, HIDDEN_PAD), full),            # b1
            pl.BlockSpec((HIDDEN_PAD, HIDDEN_PAD), full),   # w2
            pl.BlockSpec((1, HIDDEN_PAD), full),            # b2
            pl.BlockSpec((HIDDEN_PAD, out_w), full),        # fused head weights
            pl.BlockSpec((1, out_w), full),                 # fused head bias
        ],
        out_specs=pl.BlockSpec((tb, out_w), batched),
        compiler_params=pltpu.CompilerParams(
            dimension_semantics=("parallel",),              # shard batch over TCs
            vmem_limit_bytes=32 * 1024 * 1024),
        cost_estimate=cost,
    )(x, w1, b1, w2, b2, wh, bh)

    # Pad lanes of the std half hold softplus(0)+0.001 ~= 0.694; they are sliced
    # away here, inside the same jit, so the slices fuse with the kernel output.
    loc = out[:B, :out_dim]
    scale = out[:B, head_pad:head_pad + out_dim]
    return loc, scale


def init_params(key, input_dim, output_dim):
    """Deterministic synthetic parameters (logical shapes, f32, pre-transposed [in, out])."""
    ks = jax.random.split(key, 8)

    def linear(kw, kb, fan_in, fan_out):
        # torch default init: U(-1/sqrt(fan_in), 1/sqrt(fan_in))
        bound = 1.0 / jnp.sqrt(jnp.float32(fan_in))
        w = jax.random.uniform(kw, (fan_in, fan_out), jnp.float32, -bound, bound)
        b = jax.random.uniform(kb, (1, fan_out), jnp.float32, -bound, bound)
        return w, b

    w1, b1 = linear(ks[0], ks[1], input_dim, HIDDEN)
    w2, b2 = linear(ks[2], ks[3], HIDDEN, HIDDEN)
    wmu, bmu = linear(ks[4], ks[5], HIDDEN, output_dim)
    wstd, bstd = linear(ks[6], ks[7], HIDDEN, output_dim)
    return (w1, b1, w2, b2, wmu, bmu, wstd, bstd)


def prepare_params(params, out_dim):
    """Pad hidden to 128 and pack/fuse the two heads into one lane-dense slab (f32)."""
    w1, b1, w2, b2, wmu, bmu, wstd, bstd = params
    in_dim = w1.shape[0]
    # pack [mu|std] into a single 128-lane slab when it fits; else lane-pad each head
    head_pad = LANE // 2 if 2 * out_dim <= LANE else _round_up(out_dim, LANE)

    def pad2(a, rows, cols):
        return jnp.pad(a, ((0, rows - a.shape[0]), (0, cols - a.shape[1])))

    w1p = pad2(w1, in_dim, HIDDEN_PAD)
    b1p = pad2(b1, 1, HIDDEN_PAD)
    w2p = pad2(w2, HIDDEN_PAD, HIDDEN_PAD)
    b2p = pad2(b2, 1, HIDDEN_PAD)
    # fused heads: columns [0, head_pad) -> mu, [head_pad, 2*head_pad) -> std
    whp = jnp.concatenate([pad2(wmu, HIDDEN_PAD, head_pad),
                           pad2(wstd, HIDDEN_PAD, head_pad)], axis=1)
    bhp = jnp.concatenate([pad2(bmu, 1, head_pad),
                           pad2(bstd, 1, head_pad)], axis=1)
    return (w1p, b1p, w2p, b2p, whp, bhp), head_pad


def reference_forward(x, params):
    w1, b1, w2, b2, wmu, bmu, wstd, bstd = params
    h1 = jax.nn.relu(x @ w1 + b1)
    h2 = jax.nn.relu(h1 @ w2 + b2)
    loc = jnp.tanh(h2 @ wmu + bmu)
    scale = jax.nn.softplus(h2 @ wstd + bstd) + 0.001
    return loc, scale


if __name__ == "__main__":
    key = jax.random.PRNGKey(0)
    k_x, k_p, k_x2 = jax.random.split(key, 3)

    batch, input_dim, output_dim = 2, 16, 4
    x = jax.random.normal(k_x, (batch, input_dim), jnp.float32)
    params = init_params(k_p, input_dim, output_dim)
    prepared, head_pad = prepare_params(params, output_dim)

    fwd = jax.jit(functools.partial(actor_critic_forward,
                                    out_dim=output_dim, head_pad=head_pad))

    loc, scale = jax.block_until_ready(fwd(x, prepared))
    ref_loc, ref_scale = reference_forward(x, params)
    assert loc.shape == ref_loc.shape and scale.shape == ref_scale.shape
    # f32 compute, bf16 output -> only bf16 rounding error vs. f32 reference
    assert jnp.allclose(loc.astype(jnp.float32), ref_loc, atol=2e-2, rtol=2e-2)
    assert jnp.allclose(scale.astype(jnp.float32), ref_scale, atol=2e-2, rtol=2e-2)

    # Larger batch: exercises the multi-step "parallel" grid (>= 2 tiles).
    xb = jax.random.normal(k_x2, (512, input_dim), jnp.float32)
    locb, scaleb = jax.block_until_ready(fwd(xb, prepared))
    refb_loc, refb_scale = reference_forward(xb, params)
    assert jnp.allclose(locb.astype(jnp.float32), refb_loc, atol=2e-2, rtol=2e-2)
    assert jnp.allclose(scaleb.astype(jnp.float32), refb_scale, atol=2e-2, rtol=2e-2)

    print("KERNEL_OK")
</pallas_src>

<mosaic_0001>
module attributes {stable_mosaic.version = 11 : i64} {
  func.func @actor_critic_kernel(%arg0: i32, %arg1: memref<16x16xf32, #tpu.memory_space<vmem>>, %arg2: memref<16x128xf32, #tpu.memory_space<vmem>>, %arg3: memref<1x128xf32, #tpu.memory_space<vmem>>, %arg4: memref<128x128xf32, #tpu.memory_space<vmem>>, %arg5: memref<1x128xf32, #tpu.memory_space<vmem>>, %arg6: memref<128x128xf32, #tpu.memory_space<vmem>>, %arg7: memref<1x128xf32, #tpu.memory_space<vmem>>, %arg8: memref<16x128xbf16, #tpu.memory_space<vmem>>) attributes {dimension_semantics = [#tpu.dimension_semantics<parallel>], iteration_bounds = array<i64: 1>, scalar_prefetch = 0 : i64, scratch_operands = 0 : i64, tpu.core_type = #tpu.core_type<tc>, window_params = [{transform_indices = @transform_0, window_bounds = array<i64: 16, 16>}, {pipeline_mode = #tpu.pipeline_mode<synchronous>, transform_indices = @transform_1, window_bounds = array<i64: 16, 128>}, {pipeline_mode = #tpu.pipeline_mode<synchronous>, transform_indices = @transform_2, window_bounds = array<i64: 1, 128>}, {pipeline_mode = #tpu.pipeline_mode<synchronous>, transform_indices = @transform_3, window_bounds = array<i64: 128, 128>}, {pipeline_mode = #tpu.pipeline_mode<synchronous>, transform_indices = @transform_4, window_bounds = array<i64: 1, 128>}, {pipeline_mode = #tpu.pipeline_mode<synchronous>, transform_indices = @transform_5, window_bounds = array<i64: 128, 128>}, {pipeline_mode = #tpu.pipeline_mode<synchronous>, transform_indices = @transform_6, window_bounds = array<i64: 1, 128>}, {transform_indices = @transform_7, window_bounds = array<i64: 16, 128>}]} {
    %c0 = arith.constant 0 : index
    %c0_0 = arith.constant 0 : index
    %0 = vector.load %arg1[%c0, %c0_0] : memref<16x16xf32, #tpu.memory_space<vmem>>, vector<16x16xf32>
    %c0_1 = arith.constant 0 : index
    %c0_2 = arith.constant 0 : index
    %1 = vector.load %arg2[%c0_1, %c0_2] : memref<16x128xf32, #tpu.memory_space<vmem>>, vector<16x128xf32>
    %cst = arith.constant dense<0.000000e+00> : vector<16x128xf32>
    %2 = tpu.matmul %0, %1, %cst {dimension_numbers = #tpu.dot_dimension_numbers<[1], [0], [0], [1], [0, 0, 1, 1], [], []>} : vector<16x16xf32>, vector<16x128xf32>, vector<16x128xf32> -> vector<16x128xf32>
    %c0_3 = arith.constant 0 : index
    %c0_4 = arith.constant 0 : index
    %3 = vector.load %arg3[%c0_3, %c0_4] : memref<1x128xf32, #tpu.memory_space<vmem>>, vector<1x128xf32>
    %4 = vector.broadcast %3 : vector<1x128xf32> to vector<16x128xf32>
    %5 = arith.addf %2, %4 : vector<16x128xf32>
    %cst_5 = arith.constant 0.000000e+00 : f32
    %6 = vector.broadcast %cst_5 : f32 to vector<16x128xf32>
    %7 = arith.maximumf %5, %6 : vector<16x128xf32>
    %c0_6 = arith.constant 0 : index
    %c0_7 = arith.constant 0 : index
    %8 = vector.load %arg4[%c0_6, %c0_7] : memref<128x128xf32, #tpu.memory_space<vmem>>, vector<128x128xf32>
    %cst_8 = arith.constant dense<0.000000e+00> : vector<16x128xf32>
    %9 = tpu.matmul %7, %8, %cst_8 {dimension_numbers = #tpu.dot_dimension_numbers<[1], [0], [0], [1], [0, 0, 1, 1], [], []>} : vector<16x128xf32>, vector<128x128xf32>, vector<16x128xf32> -> vector<16x128xf32>
    %c0_9 = arith.constant 0 : index
    %c0_10 = arith.constant 0 : index
    %10 = vector.load %arg5[%c0_9, %c0_10] : memref<1x128xf32, #tpu.memory_space<vmem>>, vector<1x128xf32>
    %11 = vector.broadcast %10 : vector<1x128xf32> to vector<16x128xf32>
    %12 = arith.addf %9, %11 : vector<16x128xf32>
    %cst_11 = arith.constant 0.000000e+00 : f32
    %13 = vector.broadcast %cst_11 : f32 to vector<16x128xf32>
    %14 = arith.maximumf %12, %13 : vector<16x128xf32>
    %c0_12 = arith.constant 0 : index
    %c0_13 = arith.constant 0 : index
    %15 = vector.load %arg6[%c0_12, %c0_13] : memref<128x128xf32, #tpu.memory_space<vmem>>, vector<128x128xf32>
    %cst_14 = arith.constant dense<0.000000e+00> : vector<16x128xf32>
    %16 = tpu.matmul %14, %15, %cst_14 {dimension_numbers = #tpu.dot_dimension_numbers<[1], [0], [0], [1], [0, 0, 1, 1], [], []>} : vector<16x128xf32>, vector<128x128xf32>, vector<16x128xf32> -> vector<16x128xf32>
    %c0_15 = arith.constant 0 : index
    %c0_16 = arith.constant 0 : index
    %17 = vector.load %arg7[%c0_15, %c0_16] : memref<1x128xf32, #tpu.memory_space<vmem>>, vector<1x128xf32>
    %18 = vector.broadcast %17 : vector<1x128xf32> to vector<16x128xf32>
    %19 = arith.addf %16, %18 : vector<16x128xf32>
    %20 = math.tanh %19 : vector<16x128xf32>
    %cst_17 = arith.constant 0.000000e+00 : f32
    %21 = vector.broadcast %cst_17 : f32 to vector<16x128xf32>
    %22 = arith.maximumf %19, %21 : vector<16x128xf32>
    %23 = math.absf %19 : vector<16x128xf32>
    %cst_18 = arith.constant 0.000000e+00 : f32
    %24 = vector.broadcast %cst_18 : f32 to vector<16x128xf32>
    %25 = arith.subf %24, %23 : vector<16x128xf32>
    %26 = math.exp %25 : vector<16x128xf32>
    %27 = math.log1p %26 : vector<16x128xf32>
    %28 = arith.addf %22, %27 : vector<16x128xf32>
    %cst_19 = arith.constant 1.000000e-03 : f32
    %29 = vector.broadcast %cst_19 : f32 to vector<16x128xf32>
    %30 = arith.addf %28, %29 : vector<16x128xf32>
    %31 = tpu.iota {dimensions = array<i32: 1>} : vector<16x128xi32>
    %c64_i32 = arith.constant 64 : i32
    %32 = vector.broadcast %c64_i32 : i32 to vector<16x128xi32>
    %33 = arith.cmpi slt, %31, %32 : vector<16x128xi32>
    %34 = arith.select %33, %20, %30 : vector<16x128xi1>, vector<16x128xf32>
    %35 = arith.truncf %34 : vector<16x128xf32> to vector<16x128xbf16>
    %c0_20 = arith.constant 0 : index
    %c0_21 = arith.constant 0 : index
    %36 = vector.load %arg8[%c0_20, %c0_21] : memref<16x128xbf16, #tpu.memory_space<vmem>>, vector<16x128xbf16>
    tpu.vector_store %arg8[%c0_20, %c0_21], %35 {strides = array<i32>} : memref<16x128xbf16, #tpu.memory_space<vmem>>, vector<16x128xbf16>,
    return
  }
  func.func @transform_0(%arg0: i32) -> (i32, i32) {
    %c0_i32 = arith.constant 0 : i32
    %c0_i32_0 = arith.constant 0 : i32
    return %arg0, %c0_i32 : i32, i32
  }
  func.func @transform_1(%arg0: i32) -> (i32, i32) {
    %c0_i32 = arith.constant 0 : i32
    %c0_i32_0 = arith.constant 0 : i32
    %c0_i32_1 = arith.constant 0 : i32
    return %c0_i32, %c0_i32_0 : i32, i32
  }
  func.func @transform_2(%arg0: i32) -> (i32, i32) {
    %c0_i32 = arith.constant 0 : i32
    %c0_i32_0 = arith.constant 0 : i32
    %c0_i32_1 = arith.constant 0 : i32
    return %c0_i32, %c0_i32_0 : i32, i32
  }
  func.func @transform_3(%arg0: i32) -> (i32, i32) {
    %c0_i32 = arith.constant 0 : i32
    %c0_i32_0 = arith.constant 0 : i32
    %c0_i32_1 = arith.constant 0 : i32
    return %c0_i32, %c0_i32_0 : i32, i32
  }
  func.func @transform_4(%arg0: i32) -> (i32, i32) {
    %c0_i32 = arith.constant 0 : i32
    %c0_i32_0 = arith.constant 0 : i32
    %c0_i32_1 = arith.constant 0 : i32
    return %c0_i32, %c0_i32_0 : i32, i32
  }
  func.func @transform_5(%arg0: i32) -> (i32, i32) {
    %c0_i32 = arith.constant 0 : i32
    %c0_i32_0 = arith.constant 0 : i32
    %c0_i32_1 = arith.constant 0 : i32
    return %c0_i32, %c0_i32_0 : i32, i32
  }
  func.func @transform_6(%arg0: i32) -> (i32, i32) {
    %c0_i32 = arith.constant 0 : i32
    %c0_i32_0 = arith.constant 0 : i32
    %c0_i32_1 = arith.constant 0 : i32
    return %c0_i32, %c0_i32_0 : i32, i32
  }
  func.func @transform_7(%arg0: i32) -> (i32, i32) {
    %c0_i32 = arith.constant 0 : i32
    %c0_i32_0 = arith.constant 0 : i32
    return %arg0, %c0_i32 : i32, i32
  }
}

</mosaic_0001>

<llo_original>
// kernel: actor_critic_forward.1
$region0: #{actor_critic_forward.1}
  #allocation0 [shape = 'u32[]', space=smem, size = 0x4, offset = 0x4, fixed_abs, tag = 'smem constant byte address 0x4 - core index']
  #allocation1 [shape = 'u32[72,128]{1,0:T(1,128)}', space=vmem, size = 0x9000, scoped, tag = 'internal scratch']
  %s0 = inlined_call_operand.vmem [shape: f32[16,16], index: 0, kind: input, shape index: {}]
  %s1 = inlined_call_operand.vmem [shape: f32[16,128], index: 1, kind: input, shape index: {}]
  %s2 = inlined_call_operand.vmem [shape: f32[1,128], index: 2, kind: input, shape index: {}]
  %s3 = inlined_call_operand.hbm [shape: f32[128,128], index: 3, kind: input, shape index: {}]
  %s4 = inlined_call_operand.vmem [shape: f32[1,128], index: 4, kind: input, shape index: {}]
  %s5 = inlined_call_operand.hbm [shape: f32[128,128], index: 5, kind: input, shape index: {}]
  %s6 = inlined_call_operand.vmem [shape: f32[1,128], index: 6, kind: input, shape index: {}]
  %s7 = inlined_call_operand.vmem [shape: bf16[16,128], index: 7, kind: output, shape index: {}]
  %s8 = sld [smem:[#allocation0]]
  $region46: #{actor_critic_forward.1} parent=0
    _
  %s10 = ssub.s32 1, %s8
  %s11 = scalar_select 0, %s10, %s8
  $region1: #{actor_critic_forward.1} parent=0
    #allocation2 [shape = 'u8[65536]{0}', space=vmem, size = 0x10000, scoped, tag = 'input window, operand 3, single buffered']
    #allocation3 [shape = 's32[1]{0}', space=sflag, size = 0x4, scoped, tag = 'scoped memory for actor_critic_forward.1']
    #allocation4 [shape = 'u8[65536]{0}', space=vmem, size = 0x10000, scoped, tag = 'input window, operand 5, single buffered']
    #allocation5 [shape = 's32[1]{0}', space=sflag, size = 0x4, scoped, tag = 'scoped memory for actor_critic_forward.1']
    %12 = vsyncpa [#allocation3], 0
    %13 = vsyncpa [#allocation5], 0
    // Predicated region
    $region2: #{actor_critic_forward.1} parent=1 // pred_check
      _
    $region3: #{actor_critic_forward.1} parent=1 // pred_check_branch
      %15 = sbr.rel (0) target = $region5
    $region4: #{actor_critic_forward.1} parent=1 // pred_region
      _
    $region5: #{actor_critic_forward.1} parent=1 // pred_fallthru
      _
    // Predicated region
    $region6: #{actor_critic_forward.1} parent=1 // pred_check
      _
    $region7: #{actor_critic_forward.1} parent=1 // pred_check_branch
      %17 = sbr.rel (0) target = $region9
    $region8: #{actor_critic_forward.1} parent=1 // pred_region
      _
    $region9: #{actor_critic_forward.1} parent=1 // pred_fallthru
      _
    // Predicated region
    $region10: #{actor_critic_forward.1} parent=1 // pred_check
      _
    $region11: #{actor_critic_forward.1} parent=1 // pred_check_branch
      %19 = sbr.rel (0) target = $region13
    $region12: #{actor_critic_forward.1} parent=1 // pred_region
      _
    $region13: #{actor_critic_forward.1} parent=1 // pred_fallthru
      _
    // Predicated region
    $region14: #{actor_critic_forward.1} parent=1 // pred_check
      _
    $region15: #{actor_critic_forward.1} parent=1 // pred_check_branch
      %21 = sbr.rel (0) target = $region17
    $region16: #{actor_critic_forward.1} parent=1 // pred_region
      %23 = vsyncadd [#allocation3], 0
      %s24 = sshll.u32 %s3, 4
      %s25 = int_to_ptr.hbm [resolvable:$true] %s24
      %s26 = sshll.u32 [#allocation2], 4
      %s27 = int_to_ptr.vmem [resolvable:$true] %s26
      %32 = dma.hbm_to_vmem [thread:$0]  %s25, 2048, %s27, [#allocation3], 128, 128, 8
    $region17: #{actor_critic_forward.1} parent=1 // pred_fallthru
      _
    // Predicated region
    $region18: #{actor_critic_forward.1} parent=1 // pred_check
      _
    $region19: #{actor_critic_forward.1} parent=1 // pred_check_branch
      %34 = sbr.rel (0) target = $region21
    $region20: #{actor_critic_forward.1} parent=1 // pred_region
      _
    $region21: #{actor_critic_forward.1} parent=1 // pred_fallthru
      _
    // Predicated region
    $region22: #{actor_critic_forward.1} parent=1 // pred_check
      _
    $region23: #{actor_critic_forward.1} parent=1 // pred_check_branch
      %36 = sbr.rel (0) target = $region25
    $region24: #{actor_critic_forward.1} parent=1 // pred_region
      %38 = vsyncadd [#allocation5], 0
      %s39 = sshll.u32 %s5, 4
      %s40 = int_to_ptr.hbm [resolvable:$true] %s39
      %s41 = sshll.u32 [#allocation4], 4
      %s42 = int_to_ptr.vmem [resolvable:$true] %s41
      %47 = dma.hbm_to_vmem [thread:$0]  %s40, 2048, %s42, [#allocation5], 128, 128, 8
    $region25: #{actor_critic_forward.1} parent=1 // pred_fallthru
      _
    // Predicated region
    $region26: #{actor_critic_forward.1} parent=1 // pred_check
      _
    $region27: #{actor_critic_forward.1} parent=1 // pred_check_branch
      %49 = sbr.rel (0) target = $region29
    $region28: #{actor_critic_forward.1} parent=1 // pred_region
      _
    $region29: #{actor_critic_forward.1} parent=1 // pred_fallthru
      _
    // Predicated region
    $region30: #{actor_critic_forward.1} parent=1 // pred_check
      _
    $region31: #{actor_critic_forward.1} parent=1 // pred_check_branch
      %51 = sbr.rel (0) target = $region33
    $region32: #{actor_critic_forward.1} parent=1 // pred_region
      %53 = dma.done [#allocation3], 2048
    $region33: #{actor_critic_forward.1} parent=1 // pred_fallthru
      _
    // Predicated region
    $region34: #{actor_critic_forward.1} parent=1 // pred_check
      _
    $region35: #{actor_critic_forward.1} parent=1 // pred_check_branch
      %55 = sbr.rel (0) target = $region37
    $region36: #{actor_critic_forward.1} parent=1 // pred_region
      %57 = dma.done [#allocation5], 2048
    $region37: #{actor_critic_forward.1} parent=1 // pred_fallthru
      _
    %v58 = vld [vmem:[%s0] sm:$0xff]
    %v59 = vld [vmem:[%s0 + $0x8] sm:$0xff]
    %v60 = vld [vmem:[%s1] sm:$0xff]
    %v61 = vld [vmem:[%s1 + $0x8] sm:$0xff]
    %v62 = vld [vmem:[%s2] sm:$0x1]
    %v64 = vperm.slane %v62, 0
    %vm66 = vcmask 130048
    %v68 = vsel %vm66, %v58, 0
    %v71 = vsel %vm66, %v59, 0
    %73 = vmatpush.msra.mxu0 0.0
    %74 = vmatpush.msra.mxu0 0.0
    %75 = vmatpush.msra.mxu0 0.0
    %76 = vmatpush.msra.mxu0 0.0
    %77 = vmatpush.msra.mxu0 0.0
    %78 = vmatpush.msra.mxu0 0.0
    %79 = vmatpush.msra.mxu0 0.0
    %80 = vmatpush.msra.mxu0 0.0
    %81 = vmatpush.msra.mxu0 0.0
    %82 = vmatpush.msra.mxu0 0.0
    %83 = vmatpush.msra.mxu0 0.0
    %84 = vmatpush.msra.mxu0 0.0
    %85 = vmatpush.msra.mxu0 0.0
    %86 = vmatpush.msra.mxu0 0.0
    %87 = vmatpush.msra.mxu0 %v61
    %88 = vmatpush.msra.mxu0 %v60
    %89 = vmatmul.f32.gmra.mxu0 %v68
    %v90 = vpop.f32.mrf.mxu0
    %v91 = vadd.f32 %v64, %v90
    %92 = vmatmul.f32.gmra.mxu0 %v71
    %v93 = vpop.f32.mrf.mxu0
    %v94 = vadd.f32 %v64, %v93
    %95 = vdwg.mxu0
    %v96 = vmax.f32 %v91, 0.0
    %v97 = vmax.f32 %v94, 0.0
    %v98 = vld [vmem:[#allocation2] sm:$0xff]
    %v99 = vld [vmem:[#allocation2 + $0x8] sm:$0xff]
    %v100 = vld [vmem:[#allocation2 + $0x10] sm:$0xff]
    %v101 = vld [vmem:[#allocation2 + $0x18] sm:$0xff]
    %v102 = vld [vmem:[#allocation2 + $0x20] sm:$0xff]
    %v103 = vld [vmem:[#allocation2 + $0x28] sm:$0xff]
    %v104 = vld [vmem:[#allocation2 + $0x30] sm:$0xff]
    %v105 = vld [vmem:[#allocation2 + $0x38] sm:$0xff]
    %v106 = vld [vmem:[#allocation2 + $0x40] sm:$0xff]
    %v107 = vld [vmem:[#allocation2 + $0x48] sm:$0xff]
    %v108 = vld [vmem:[#allocation2 + $0x50] sm:$0xff]
    %v109 = vld [vmem:[#allocation2 + $0x58] sm:$0xff]
    %v110 = vld [vmem:[#allocation2 + $0x60] sm:$0xff]
    %v111 = vld [vmem:[#allocation2 + $0x68] sm:$0xff]
    %v112 = vld [vmem:[#allocation2 + $0x70] sm:$0xff]
    %v113 = vld [vmem:[#allocation2 + $0x78] sm:$0xff]
    %v114 = vld [vmem:[%s4] sm:$0x1]
    %v116 = vperm.slane %v114, 0
    %118 = vmatpush.msra.mxu0 %v113
    %119 = vmatpush.msra.mxu0 %v112
    %120 = vmatpush.msra.mxu0 %v111
    %121 = vmatpush.msra.mxu0 %v110
    %122 = vmatpush.msra.mxu0 %v109
    %123 = vmatpush.msra.mxu0 %v108
    %124 = vmatpush.msra.mxu0 %v107
    %125 = vmatpush.msra.mxu0 %v106
    %126 = vmatpush.msra.mxu0 %v105
    %127 = vmatpush.msra.mxu0 %v104
    %128 = vmatpush.msra.mxu0 %v103
    %129 = vmatpush.msra.mxu0 %v102
    %130 = vmatpush.msra.mxu0 %v101
    %131 = vmatpush.msra.mxu0 %v100
    %132 = vmatpush.msra.mxu0 %v99
    %133 = vmatpush.msra.mxu0 %v98
    %134 = vmatmul.f32.gmra.mxu0 %v96
    %v135 = vpop.f32.mrf.mxu0
    %v136 = vadd.f32 %v116, %v135
    %137 = vmatmul.f32.gmra.mxu0 %v97
    %v138 = vpop.f32.mrf.mxu0
    %v139 = vadd.f32 %v116, %v138
    %140 = vdwg.mxu0
    %v141 = vmax.f32 %v136, 0.0
    %v142 = vmax.f32 %v139, 0.0
    %v143 = vld [vmem:[#allocation4] sm:$0xff]
    %v144 = vld [vmem:[#allocation4 + $0x8] sm:$0xff]
    %v145 = vld [vmem:[#allocation4 + $0x10] sm:$0xff]
    %v146 = vld [vmem:[#allocation4 + $0x18] sm:$0xff]
    %v147 = vld [vmem:[#allocation4 + $0x20] sm:$0xff]
    %v148 = vld [vmem:[#allocation4 + $0x28] sm:$0xff]
    %v149 = vld [vmem:[#allocation4 + $0x30] sm:$0xff]
    %v150 = vld [vmem:[#allocation4 + $0x38] sm:$0xff]
    %v151 = vld [vmem:[#allocation4 + $0x40] sm:$0xff]
    %v152 = vld [vmem:[#allocation4 + $0x48] sm:$0xff]
    %v153 = vld [vmem:[#allocation4 + $0x50] sm:$0xff]
    %v154 = vld [vmem:[#allocation4 + $0x58] sm:$0xff]
    %v155 = vld [vmem:[#allocation4 + $0x60] sm:$0xff]
    %v156 = vld [vmem:[#allocation4 + $0x68] sm:$0xff]
    %v157 = vld [vmem:[#allocation4 + $0x70] sm:$0xff]
    %v158 = vld [vmem:[#allocation4 + $0x78] sm:$0xff]
    %v159 = vld [vmem:[%s6] sm:$0x1]
    %v161 = vperm.slane %v159, 0
    %163 = vmatpush.msra.mxu0 %v158
    %164 = vmatpush.msra.mxu0 %v157
    %165 = vmatpush.msra.mxu0 %v156
    %166 = vmatpush.msra.mxu0 %v155
    %167 = vmatpush.msra.mxu0 %v154
    %168 = vmatpush.msra.mxu0 %v153
    %169 = vmatpush.msra.mxu0 %v152
    %170 = vmatpush.msra.mxu0 %v151
    %171 = vmatpush.msra.mxu0 %v150
    %172 = vmatpush.msra.mxu0 %v149
    %173 = vmatpush.msra.mxu0 %v148
    %174 = vmatpush.msra.mxu0 %v147
    %175 = vmatpush.msra.mxu0 %v146
    %176 = vmatpush.msra.mxu0 %v145
    %177 = vmatpush.msra.mxu0 %v144
    %178 = vmatpush.msra.mxu0 %v143
    %179 = vmatmul.f32.gmra.mxu0 %v141
    %v180 = vpop.f32.mrf.mxu0
    %v181 = vadd.f32 %v161, %v180
    %182 = vmatmul.f32.gmra.mxu0 %v142
    %v183 = vpop.f32.mrf.mxu0
    %v184 = vadd.f32 %v161, %v183
    %185 = vdwg.mxu0
    %v186 = vtanh.pop %v181
    %v187 = vtanh.pop %v184
    %v188 = vmax.f32 %v181, 0.0
    %v189 = vmax.f32 %v184, 0.0
    %v190 = vand.u32 2147483647, %v181
    %v191 = vand.u32 2147483647, %v184
    %v192 = vsub.f32 0.0, %v190
    %v193 = vsub.f32 0.0, %v191
    %v194 = vmul.f32 %v192, 1.442695
    %v195 = vpow.pop %v194
    %v196 = vmul.f32 %v193, 1.442695
    %v197 = vpow.pop %v196
    %v198 = vadd.f32 %v195, 1.0
    %v199 = vlog2.pop %v198
    %v200 = vmul.f32 %v199, 0.6931472
    %v201 = vmul.f32 -0.5, %v195
    %v202 = vadd.f32 %v201, 1.0
    %v203 = vmul.f32 %v202, %v195
    %v204 = vand.u32 2147483647, %v195
    %vm205 = vcmp.lt.f32.partialorder %v204, 0.0004427343
    %v206 = vsel %vm205, %v203, %v200
    %v207 = vadd.f32 %v197, 1.0
    %v208 = vlog2.pop %v207
    %v209 = vmul.f32 %v208, 0.6931472
    %v210 = vmul.f32 -0.5, %v197
    %v211 = vadd.f32 %v210, 1.0
    %v212 = vmul.f32 %v211, %v197
    %v213 = vand.u32 2147483647, %v197
    %vm214 = vcmp.lt.f32.partialorder %v213, 0.0004427343
    %v215 = vsel %vm214, %v212, %v209
    %v216 = vadd.f32 %v188, %v206
    %v217 = vadd.f32 %v189, %v215
    %v218 = vadd.f32 %v216, 0.001
    %v219 = vadd.f32 %v217, 0.001
    %v220 = vlaneseq
    %v221 = vand.u32 %v220, 127
    %vm222 = vcmp.lt.s32.totalorder %v221, 64
    %v223 = vsel %vm222, %v186, %v218
    %v224 = vsel %vm222, %v187, %v219
    %v225 = vpack.c.bf16 %v223, %v223
    %v226 = vpack.c.bf16 %v224, %v224
    %227 = vst [vmem:[%s7] sm:$0xf] %v225
    %228 = vst [vmem:[%s7 + $0x4] sm:$0xf] %v226
    // Predicated region
    $region38: #{actor_critic_forward.1} parent=1 // pred_check
      _
    $region39: #{actor_critic_forward.1} parent=1 // pred_check_branch
      %230 = sbr.rel (0) target = $region41
    $region40: #{actor_critic_forward.1} parent=1 // pred_region
      _
    $region41: #{actor_critic_forward.1} parent=1 // pred_fallthru
      _
    // Predicated region
    $region42: #{actor_critic_forward.1} parent=1 // pred_check
      _
    $region43: #{actor_critic_forward.1} parent=1 // pred_check_branch
      %232 = sbr.rel (0) target = $region45
    $region44: #{actor_critic_forward.1} parent=1 // pred_region
      _
    $region45: #{actor_critic_forward.1} parent=1 // pred_fallthru
      _
    %233 = vsyncpa [#allocation3], 1
    %234 = vsyncpa [#allocation5], 1

</llo_original>
